<compile_context>
chip_gen: v6e
topology: v6e:2x2x1
jax: 0.10.0
libtpu: 0.0.40
codegen_flags: <defaults>
</compile_context>

<pallas_src>
import functools

import jax
import jax.numpy as jnp
from jax.experimental import pallas as pl
from jax.experimental.pallas import tpu as pltpu

_LANES = 128


# ----------------------------------------------------------------------------
# Static recursive formula structure (mirrors SingleParameterFormula.__init__)
# ----------------------------------------------------------------------------
def _build_tree(depth, counter):
    """Nested tuple describing the formula tree; assigns each scalar parameter
    a slot index in the flat (1, P) parameter vector."""
    if depth == 0:
        idx = counter[0]
        counter[0] += 1                       # lambda_0
        return ("leaf", idx)
    inner = _build_tree(depth - 1, counter) if depth > 1 else None
    i_lam = counter[0]; counter[0] += 1       # lambda_1
    i_pow = counter[0]; counter[0] += 1       # power_1
    outer = _build_tree(depth - 1, counter)
    return ("node", i_lam, i_pow, inner, outer)


def _count_pow_nodes(tree):
    if tree[0] == "leaf":
        return 0
    _, _, _, inner, outer = tree
    n = 1 + _count_pow_nodes(outer)
    if inner is not None:
        n += _count_pow_nodes(inner)
    return n


def _eval_tree(tree, log_x, get, use_bf16_exp):
    """Trace-time-unrolled evaluation on a lane-dense 2-D slab.

    The 'outer' chain is accumulated iteratively (running sum) so only one
    slab-sized intermediate stays live regardless of depth; 'inner' subtrees
    recurse (each using the same iterative scheme)."""
    acc = None
    node = tree
    while node[0] == "node":
        _, i_lam, i_pow, inner, outer = node
        p_logx = get(i_pow) * log_x
        if use_bf16_exp:
            # bf16 EUP path (v6e/v7x) for deep, compute-bound trees.
            x_powered = jnp.exp(p_logx.astype(jnp.bfloat16)).astype(jnp.float32)
        else:
            x_powered = jnp.exp(p_logx)
        term = get(i_lam) * x_powered
        if inner is not None:                  # skip *1 when there is no inner
            term = term * _eval_tree(inner, log_x, get, use_bf16_exp)
        acc = term if acc is None else acc + term
        node = outer
    leaf = get(node[1])                        # lambda_0 scalar
    if acc is None:
        # depth-0 formula: broadcast the scalar to the slab shape once.
        return jnp.full(log_x.shape, leaf, dtype=log_x.dtype)
    return acc + leaf                          # scalar broadcast, no full slab


# ----------------------------------------------------------------------------
# Pallas kernel
# ----------------------------------------------------------------------------
def _formula_kernel(tree, use_bf16_exp, params_ref, x_ref, out_ref):
    # params_ref: SMEM (1, P) scalars; x_ref / out_ref: VMEM (tile, 128) slabs.
    x = x_ref[...]
    log_x = jnp.log(x)                         # shared across all power nodes
    get = lambda i: params_ref[0, i]
    out_ref[...] = _eval_tree(tree, log_x, get, use_bf16_exp).astype(out_ref.dtype)


def make_single_parameter_formula(depth):
    """Returns (apply_fn, num_params, tree) for a formula of given depth."""
    counter = [0]
    tree = _build_tree(depth, counter)
    n_params = counter[0]
    n_pow = _count_pow_nodes(tree)

    def apply_fn(params, x, *, tile_sub=4096, use_bf16_exp=False):
        assert params.shape == (1, n_params)
        n = x.shape[0]

        # Column-only: only N*4 bytes of x are needed.  allow_input_fusion
        # lets XLA fold this slice/cast/pad/reshape into the input DMA.
        col = x[:, 0].astype(jnp.float32)

        # Lane-dense slab, padded only to an (8,128)-aligned boundary.
        n_rows = pl.cdiv(n, _LANES)
        rows_p = pl.cdiv(n_rows, 8) * 8            # sublane-align the slab
        pad = rows_p * _LANES - n                   # <= 1023 elements
        if pad:
            col = jnp.concatenate([col, jnp.ones((pad,), jnp.float32)])
        slab = col.reshape(rows_p, _LANES)

        # Tile selection: big blocks (amortize ~0.35us/step), sublane-aligned,
        # but capped so the grid keeps >= ~8 steps for v7x megacore sharding.
        min_steps = 8
        cap = max(8, (pl.cdiv(rows_p, min_steps) // 8) * 8)
        tile = max(8, min((tile_sub // 8) * 8, rows_p, cap))
        grid = (pl.cdiv(rows_p, tile),)             # ragged last block is OK

        elems = rows_p * _LANES
        cost = pl.CostEstimate(
            flops=(5 * n_pow + 2) * elems,
            transcendentals=(n_pow + 1) * elems,    # 1 shared log + 1 exp/node
            bytes_accessed=2 * elems * 4 + n_params * 4,
        )

        kernel = functools.partial(_formula_kernel, tree, use_bf16_exp)
        out_slab = pl.pallas_call(
            kernel,
            out_shape=jax.ShapeDtypeStruct((rows_p, _LANES), jnp.float32),
            grid=grid,
            in_specs=[
                pl.BlockSpec(memory_space=pltpu.MemorySpace.SMEM),   # params
                pl.BlockSpec((tile, _LANES), lambda i: (i, 0)),      # x slab
            ],
            out_specs=pl.BlockSpec((tile, _LANES), lambda i: (i, 0)),
            compiler_params=pltpu.CompilerParams(
                dimension_semantics=("parallel",),      # megacore on v7x
                vmem_limit_bytes=32 * 1024 * 1024,      # safe on all gens
                allow_input_fusion=[False, True],       # fuse slab producer
            ),
            cost_estimate=cost,
        )(params, slab)

        # Drop padded lanes and return (N, 1) like the PyTorch module.
        # TODO(synk): for a fused downstream consumer, return the lane-dense
        # slab directly (or keep N a multiple of 1024) to skip this slice pass.
        return out_slab.reshape(-1)[:n].reshape(n, 1)

    return apply_fn, n_params, tree


# ----------------------------------------------------------------------------
# Pure-JAX reference (mirrors the PyTorch forward with torch.pow semantics)
# ----------------------------------------------------------------------------
def _reference(tree, params, x):
    x_col = x[:, 0:1]
    get = lambda i: params[0, i]

    def ev(t):
        if t[0] == "leaf":
            return jnp.full_like(x_col, get(t[1]))
        _, i_lam, i_pow, inner, outer = t
        val = get(i_lam) * jnp.power(x_col, get(i_pow))
        if inner is not None:
            val = val * ev(inner)
        return val + ev(outer)

    return ev(tree)


if __name__ == "__main__":
    key = jax.random.PRNGKey(0)
    k_p, k_x = jax.random.split(key)

    # ---- depth-2 formula, small input (N=8, F=4; only column 0 is used) ----
    apply_fn, n_params, tree = make_single_parameter_formula(2)
    # Mirrors nn.Parameter(2 * torch.randn((1,1))) for every lambda/power,
    # flattened into one (1, P) vector.
    params = (2.0 * jax.random.normal(k_p, (1, n_params))).astype(jnp.float32)
    # Keep x > 0 so x**power (real exponent) is finite, matching torch.pow use.
    x_small = jax.random.uniform(k_x, (8, 4), dtype=jnp.float32,
                                 minval=0.1, maxval=2.0)
    out_small = jax.block_until_ready(apply_fn(params, x_small))
    ref_small = _reference(tree, params, x_small)
    assert out_small.shape == (8, 1)
    assert jnp.all(jnp.isfinite(out_small))
    assert jnp.allclose(out_small, ref_small, rtol=1e-3, atol=1e-3)

    # ---- larger input exercising sublane padding + multi-step grid ----
    x_big = jax.random.uniform(jax.random.PRNGKey(1), (2600, 4),
                               dtype=jnp.float32, minval=0.1, maxval=2.0)
    out_big = jax.block_until_ready(apply_fn(params, x_big, tile_sub=8))
    ref_big = _reference(tree, params, x_big)
    assert out_big.shape == (2600, 1)
    assert jnp.all(jnp.isfinite(out_big))
    assert jnp.allclose(out_big, ref_big, rtol=1e-3, atol=1e-3)

    # ---- depth-0 formula (pure broadcast of lambda_0) ----
    apply0, n_params0, tree0 = make_single_parameter_formula(0)
    params0 = (2.0 * jax.random.normal(jax.random.PRNGKey(2),
                                       (1, n_params0))).astype(jnp.float32)
    out0 = jax.block_until_ready(apply0(params0, x_small))
    ref0 = _reference(tree0, params0, x_small)
    assert out0.shape == (8, 1)
    assert jnp.allclose(out0, ref0, rtol=1e-6, atol=1e-6)

    print("KERNEL_OK")
</pallas_src>

<mosaic_0001>
module attributes {stable_mosaic.version = 11 : i64} {
  func.func @_formula_kernel(%arg0: i32, %arg1: memref<1x8xf32, #tpu.memory_space<smem>>, %arg2: memref<8x128xf32, #tpu.memory_space<vmem>>, %arg3: memref<8x128xf32, #tpu.memory_space<vmem>>) attributes {dimension_semantics = [#tpu.dimension_semantics<parallel>], iteration_bounds = array<i64: 1>, scalar_prefetch = 0 : i64, scratch_operands = 0 : i64, tpu.core_type = #tpu.core_type<tc>, window_params = [{transform_indices = @transform_0, window_bounds = array<i64: 1, 8>}, {transform_indices = @transform_1, window_bounds = array<i64: 8, 128>}, {transform_indices = @transform_2, window_bounds = array<i64: 8, 128>}]} {
    %c0 = arith.constant 0 : index
    %c0_0 = arith.constant 0 : index
    %0 = vector.load %arg2[%c0, %c0_0] : memref<8x128xf32, #tpu.memory_space<vmem>>, vector<8x128xf32>
    %1 = math.log %0 : vector<8x128xf32>
    %c0_1 = arith.constant 0 : index
    %c4 = arith.constant 4 : index
    %2 = memref.load %arg1[%c0_1, %c4] : memref<1x8xf32, #tpu.memory_space<smem>>
    %3 = vector.broadcast %2 : f32 to vector<8x128xf32>
    %4 = arith.mulf %3, %1 : vector<8x128xf32>
    %5 = math.exp %4 : vector<8x128xf32>
    %c0_2 = arith.constant 0 : index
    %c3 = arith.constant 3 : index
    %6 = memref.load %arg1[%c0_2, %c3] : memref<1x8xf32, #tpu.memory_space<smem>>
    %7 = vector.broadcast %6 : f32 to vector<8x128xf32>
    %8 = arith.mulf %7, %5 : vector<8x128xf32>
    %c0_3 = arith.constant 0 : index
    %c1 = arith.constant 1 : index
    %9 = memref.load %arg1[%c0_3, %c1] : memref<1x8xf32, #tpu.memory_space<smem>>
    %10 = vector.broadcast %9 : f32 to vector<8x128xf32>
    %11 = arith.mulf %10, %1 : vector<8x128xf32>
    %12 = math.exp %11 : vector<8x128xf32>
    %c0_4 = arith.constant 0 : index
    %c0_5 = arith.constant 0 : index
    %13 = memref.load %arg1[%c0_4, %c0_5] : memref<1x8xf32, #tpu.memory_space<smem>>
    %14 = vector.broadcast %13 : f32 to vector<8x128xf32>
    %15 = arith.mulf %14, %12 : vector<8x128xf32>
    %c0_6 = arith.constant 0 : index
    %c2 = arith.constant 2 : index
    %16 = memref.load %arg1[%c0_6, %c2] : memref<1x8xf32, #tpu.memory_space<smem>>
    %17 = vector.broadcast %16 : f32 to vector<8x128xf32>
    %18 = arith.addf %15, %17 : vector<8x128xf32>
    %19 = arith.mulf %8, %18 : vector<8x128xf32>
    %c0_7 = arith.constant 0 : index
    %c6 = arith.constant 6 : index
    %20 = memref.load %arg1[%c0_7, %c6] : memref<1x8xf32, #tpu.memory_space<smem>>
    %21 = vector.broadcast %20 : f32 to vector<8x128xf32>
    %22 = arith.mulf %21, %1 : vector<8x128xf32>
    %23 = math.exp %22 : vector<8x128xf32>
    %c0_8 = arith.constant 0 : index
    %c5 = arith.constant 5 : index
    %24 = memref.load %arg1[%c0_8, %c5] : memref<1x8xf32, #tpu.memory_space<smem>>
    %25 = vector.broadcast %24 : f32 to vector<8x128xf32>
    %26 = arith.mulf %25, %23 : vector<8x128xf32>
    %27 = arith.addf %19, %26 : vector<8x128xf32>
    %c0_9 = arith.constant 0 : index
    %c7 = arith.constant 7 : index
    %28 = memref.load %arg1[%c0_9, %c7] : memref<1x8xf32, #tpu.memory_space<smem>>
    %29 = vector.broadcast %28 : f32 to vector<8x128xf32>
    %30 = arith.addf %27, %29 : vector<8x128xf32>
    %c0_10 = arith.constant 0 : index
    %c0_11 = arith.constant 0 : index
    %31 = vector.load %arg3[%c0_10, %c0_11] : memref<8x128xf32, #tpu.memory_space<vmem>>, vector<8x128xf32>
    tpu.vector_store %arg3[%c0_10, %c0_11], %30 {strides = array<i32>} : memref<8x128xf32, #tpu.memory_space<vmem>>, vector<8x128xf32>,
    return
  }
  func.func @transform_0(%arg0: i32) -> (i32, i32) {
    %c0_i32 = arith.constant 0 : i32
    %c0_i32_0 = arith.constant 0 : i32
    %c0_i32_1 = arith.constant 0 : i32
    return %c0_i32, %c0_i32_0 : i32, i32
  }
  func.func @transform_1(%arg0: i32) -> (i32, i32) {
    %c0_i32 = arith.constant 0 : i32
    %c0_i32_0 = arith.constant 0 : i32
    return %arg0, %c0_i32 : i32, i32
  }
  func.func @transform_2(%arg0: i32) -> (i32, i32) {
    %c0_i32 = arith.constant 0 : i32
    %c0_i32_0 = arith.constant 0 : i32
    return %arg0, %c0_i32 : i32, i32
  }
}

</mosaic_0001>

<llo_original>
// kernel: tpu_custom_call.1
$region0: #{tpu_custom_call.1}
  #allocation0 [shape = 'u32[]', space=smem, size = 0x4, offset = 0x4, fixed_abs, tag = 'smem constant byte address 0x4 - core index']
  #allocation1 [shape = 'u32[144,128]{1,0:T(1,128)}', space=vmem, size = 0x12000, scoped, tag = 'internal scratch']
  %s0 = inlined_call_operand.hbm [shape: f32[1,8], index: 0, kind: input, shape index: {}]
  %s1 = inlined_call_operand.hbm [shape: f32[8,128], index: 1, kind: input, shape index: {}]
  %s2 = inlined_call_operand.hbm [shape: f32[8,128], index: 2, kind: output, shape index: {}]
  %s3 = sld [smem:[#allocation0]]
  $region26: #{tpu_custom_call.1} parent=0
    _
  %s5 = ssub.s32 1, %s3
  %s6 = scalar_select 0, %s5, %s3
  $region1: #{tpu_custom_call.1} parent=0
    #allocation2 [shape = 'u8[512]{0}', space=smem, size = 0x200, scoped, tag = 'input window, operand 0, single buffered']
    #allocation3 [shape = 's32[1]{0}', space=sflag, size = 0x4, scoped, tag = 'scoped memory for tpu_custom_call.1']
    #allocation4 [shape = 's32[1]{0}', space=sflag, size = 0x4, scoped, tag = 'scoped memory for tpu_custom_call.1']
    #allocation5 [shape = 's32[1]{0}', space=sflag, size = 0x4, scoped, tag = 'scoped memory for tpu_custom_call.1']
    #allocation6 [shape = 'u8[4096]{0}', space=vmem, size = 0x1000, scoped, tag = 'input window, operand 1, single buffered']
    #allocation7 [shape = 'u8[4096]{0}', space=vmem, size = 0x1000, scoped, tag = 'output window, operand 0, single buffered']
    %7 = vsyncpa [#allocation5], 0
    %8 = vsyncpa [#allocation3], 0
    %9 = vsyncpa [#allocation4], 0
    // Predicated region
    $region2: #{tpu_custom_call.1} parent=1 // pred_check
      _
    $region3: #{tpu_custom_call.1} parent=1 // pred_check_branch
      %11 = sbr.rel (0) target = $region5
    $region4: #{tpu_custom_call.1} parent=1 // pred_region
      %s13 = ssub.s32 16, 16
      %14 = vsyncadd [#allocation5], %s13
      %17 = dma.hbm_to_smem %s0, 16, [#allocation2], [#allocation5]
    $region5: #{tpu_custom_call.1} parent=1 // pred_fallthru
      _
    // Predicated region
    $region6: #{tpu_custom_call.1} parent=1 // pred_check
      _
    $region7: #{tpu_custom_call.1} parent=1 // pred_check_branch
      %19 = sbr.rel (0) target = $region9
    $region8: #{tpu_custom_call.1} parent=1 // pred_region
      %s21 = ssub.s32 128, 128
      %22 = vsyncadd [#allocation3], %s21
      %s24 = sshll.u32 [#allocation6], 4
      %s25 = int_to_ptr.vmem [resolvable:$true] %s24
      %27 = dma.hbm_to_vmem [thread:$0]  %s1, 128, %s25, [#allocation3]
    $region9: #{tpu_custom_call.1} parent=1 // pred_fallthru
      _
    // Predicated region
    $region10: #{tpu_custom_call.1} parent=1 // pred_check
      _
    $region11: #{tpu_custom_call.1} parent=1 // pred_check_branch
      %29 = sbr.rel (0) target = $region13
    $region12: #{tpu_custom_call.1} parent=1 // pred_region
      %30 = dma.done [#allocation5], 16
    $region13: #{tpu_custom_call.1} parent=1 // pred_fallthru
      _
    // Predicated region
    $region14: #{tpu_custom_call.1} parent=1 // pred_check
      _
    $region15: #{tpu_custom_call.1} parent=1 // pred_check_branch
      %32 = sbr.rel (0) target = $region17
    $region16: #{tpu_custom_call.1} parent=1 // pred_region
      %33 = dma.done [#allocation3], 128
    $region17: #{tpu_custom_call.1} parent=1 // pred_fallthru
      _
    %34 = sfence
    %v35 = vld [vmem:[#allocation6] sm:$0xff]
    %v36 = vlog2.pop %v35
    %v37 = vmul.f32 %v36, 0.6931472
    %s38 = sld [smem:[#allocation2 + $0x4]]
    %v39 = vstv %s38
    %v40 = vmul.f32 %v39, %v37
    %v41 = vmul.f32 %v40, 1.442695
    %v42 = vpow.pop %v41
    %s43 = sld [smem:[#allocation2 + $0x3]]
    %v44 = vstv %s43
    %v45 = vmul.f32 %v44, %v42
    %s46 = sld [smem:[#allocation2 + $0x1]]
    %v47 = vstv %s46
    %v48 = vmul.f32 %v47, %v37
    %v49 = vmul.f32 %v48, 1.442695
    %v50 = vpow.pop %v49
    %s51 = sld [smem:[#allocation2]]
    %v52 = vstv %s51
    %v53 = vmul.f32 %v52, %v50
    %s54 = sld [smem:[#allocation2 + $0x2]]
    %v55 = vstv %s54
    %v56 = vadd.f32 %v53, %v55
    %v57 = vmul.f32 %v45, %v56
    %s58 = sld [smem:[#allocation2 + $0x6]]
    %v59 = vstv %s58
    %v60 = vmul.f32 %v59, %v37
    %v61 = vmul.f32 %v60, 1.442695
    %v62 = vpow.pop %v61
    %s63 = sld [smem:[#allocation2 + $0x5]]
    %v64 = vstv %s63
    %v65 = vmul.f32 %v64, %v62
    %v66 = vadd.f32 %v57, %v65
    %s67 = sld [smem:[#allocation2 + $0x7]]
    %v68 = vstv %s67
    %v69 = vadd.f32 %v66, %v68
    %70 = vst [vmem:[#allocation7] sm:$0xff] %v69
    // Predicated region
    $region18: #{tpu_custom_call.1} parent=1 // pred_check
      _
    $region19: #{tpu_custom_call.1} parent=1 // pred_check_branch
      %72 = sbr.rel (0) target = $region21
    $region20: #{tpu_custom_call.1} parent=1 // pred_region
      %s74 = ssub.s32 128, 128
      %75 = vsyncadd [#allocation4], %s74
      %s77 = sshll.u32 [#allocation7], 4
      %s78 = int_to_ptr.vmem [resolvable:$true] %s77
      %80 = dma.vmem_to_hbm [thread:$0]  %s78, 128, %s2, [#allocation4]
    $region21: #{tpu_custom_call.1} parent=1 // pred_fallthru
      _
    // Predicated region
    $region22: #{tpu_custom_call.1} parent=1 // pred_check
      _
    $region23: #{tpu_custom_call.1} parent=1 // pred_check_branch
      %82 = sbr.rel (0) target = $region25
    $region24: #{tpu_custom_call.1} parent=1 // pred_region
      %83 = dma.done [#allocation4], 128
    $region25: #{tpu_custom_call.1} parent=1 // pred_fallthru
      _
    %84 = vsyncpa [#allocation3], 1
    %85 = vsyncpa [#allocation4], 1
    %86 = vsyncpa [#allocation5], 1

</llo_original>
